<compile_context>
chip_gen: v7x
topology: tpu7x:2x2x1
jax: 0.10.0
libtpu: 0.0.40
codegen_flags: <defaults>
</compile_context>

<pallas_src>
import jax
import jax.numpy as jnp
import numpy as np
from jax.experimental import pallas as pl
from jax.experimental.pallas import tpu as pltpu


def _round_up(x, m):
    return (x + m - 1) // m * m


def _conv1d_kernel(x_hbm, w_ref, b_ref, o_ref, xbuf, sem):
    """One (batch n, length-tile l) grid step of the valid 1-D conv.

    x_hbm : (N, L_pad, Cp) in HBM (memory_space=pl.ANY), channels-last.
    w_ref : (K, Cp, Cp)  VMEM, tap-major weights.
    b_ref : (1, Cp)      VMEM, f32 bias.
    o_ref : (1, TL, Cp)  VMEM output tile.
    xbuf  : (2, TL+K-1, Cp) VMEM double buffer for the halo window.
    sem   : (2,) DMA semaphores.
    """
    n = pl.program_id(0)
    l = pl.program_id(1)
    num_l = pl.num_programs(1)

    K = w_ref.shape[0]
    TL = o_ref.shape[1]
    R = xbuf.shape[1]                        # TL + K - 1 halo window rows

    def window_copy(li, slot):
        start = pl.multiple_of(li * TL, 8)   # TL is a multiple of 8
        return pltpu.make_async_copy(
            x_hbm.at[n, pl.ds(start, R), :], xbuf.at[slot], sem.at[slot])

    slot = jax.lax.rem(l, 2)

    # Prime the double buffer at the start of every batch row.  Rows are
    # independent, so this stays correct when the "parallel" batch axis is
    # split across TensorCores (v7x megacore).
    @pl.when(l == 0)
    def _():
        window_copy(l, slot).start()

    # Wait for the current halo window (started above for l == 0, otherwise
    # prefetched by the previous grid step).
    window_copy(l, slot).wait()

    # Prefetch the next window of this row into the other slot; the DMA
    # overlaps with the matmuls below.
    @pl.when(l + 1 < num_l)
    def _():
        window_copy(l + 1, 1 - slot).start()

    window = xbuf[slot]                      # (R, Cp)

    # Bias-seeded f32 accumulator; each tap is a lane-dense MXU matmul.
    acc = b_ref[...].astype(jnp.float32)     # (1, Cp) broadcasts over rows
    for k in range(K):                       # K is small & static -> unrolled
        # NOTE: for k % 8 != 0 this slice starts at a non-8-multiple sublane;
        # an XLU-roll-on-results variant would avoid the relayout, but the
        # plain slice keeps the kernel simple and robust.
        acc = acc + jnp.dot(window[k:k + TL, :], w_ref[k],
                            preferred_element_type=jnp.float32)
    o_ref[0] = acc.astype(o_ref.dtype)


def scat_predictor_forward_nlc(x_nlc, w_kio, bias, *, mxu_dtype=jnp.float32):
    """Valid conv1d, channels-last (no layout transposes).

    x_nlc : (N, L, C), w_kio : (K, C_in, C_out), bias : (C_out,)
    Returns (N, L - K + 1, C_out) in x_nlc.dtype.
    """
    N, L, C = x_nlc.shape
    K, C_in, C_out = w_kio.shape
    assert C_in == C and C_out == C
    L_out = L - K + 1
    assert L_out >= 1

    # Lane-dense channel padding: unmasked 128-lane stores + full MXU lanes.
    Cp = _round_up(max(C, 128), 128)

    # ---- length-tile size from an explicit VMEM budget ----------------------
    # Live VMEM ~ 2*(TL+K-1)*Cp*x_item  (halo double buffer)
    #           + 2*TL*Cp*o_item        (pipelined output blocks)
    #           + 2*K*Cp*Cp*x_item      (weights, worst case double-buffered).
    # Budget sized for v7x (64 MiB physical VMEM); v5e/v6e have 128 MiB.
    x_item = jnp.dtype(mxu_dtype).itemsize
    o_item = jnp.dtype(x_nlc.dtype).itemsize
    budget = 32 * 1024 * 1024
    fixed = 2 * K * Cp * Cp * x_item + 2 * (K - 1) * Cp * x_item + 2 * Cp * 4
    per_row = Cp * (2 * x_item + 2 * o_item)
    tl_cap = max(8, (budget - fixed) // per_row // 8 * 8)
    TL = int(min(1024, tl_cap, _round_up(L_out, 8)))
    NL = int(pl.cdiv(L_out, TL))
    R = TL + K - 1
    L_pad = NL * TL + K - 1          # every halo window stays in bounds

    # ---- single-pass layout plumbing (pad + optional bf16 cast) -------------
    x_p = jnp.pad(x_nlc.astype(mxu_dtype), ((0, 0), (0, L_pad - L), (0, Cp - C)))
    w_p = jnp.pad(w_kio.astype(mxu_dtype), ((0, 0), (0, Cp - C), (0, Cp - C)))
    b_p = jnp.pad(bias.astype(jnp.float32), (0, Cp - C)).reshape(1, Cp)

    out = pl.pallas_call(
        _conv1d_kernel,
        out_shape=jax.ShapeDtypeStruct((N, NL * TL, Cp), x_nlc.dtype),
        grid_spec=pltpu.PrefetchScalarGridSpec(
            num_scalar_prefetch=0,
            grid=(N, NL),
            in_specs=[
                pl.BlockSpec(memory_space=pl.ANY),               # x stays in HBM
                pl.BlockSpec((K, Cp, Cp), lambda n, l: (0, 0, 0)),
                pl.BlockSpec((1, Cp), lambda n, l: (0, 0)),
            ],
            out_specs=pl.BlockSpec((1, TL, Cp), lambda n, l: (n, l, 0)),
            scratch_shapes=[
                pltpu.VMEM((2, R, Cp), mxu_dtype),
                pltpu.SemaphoreType.DMA((2,)),
            ],
        ),
        compiler_params=pltpu.CompilerParams(
            # batch axis shards across v7x's two TensorCores; the L-tile axis
            # carries the manual prefetch dependency -> "arbitrary".
            dimension_semantics=("parallel", "arbitrary"),
            vmem_limit_bytes=48 * 1024 * 1024,
        ),
    )(x_p, w_p, b_p)

    return out[:, :L_out, :C]


def scat_predictor_forward(s_past, weight, bias, *, mxu_dtype=jnp.float32):
    """PyTorch-layout entry point: s_past (N, C, L), weight (C_out, C_in, K),
    bias (C_out,) -> (N, C_out, L - K + 1).

    The NCL<->NLC transposes below exist only to match the nn.Conv1d
    interface; a model that keeps activations channels-last should call
    scat_predictor_forward_nlc directly and skip both HBM round trips.
    """
    x_nlc = jnp.transpose(s_past, (0, 2, 1))        # (N, L, C)
    w_kio = jnp.transpose(weight, (2, 1, 0))        # (K, C_in, C_out)
    out_nlc = scat_predictor_forward_nlc(x_nlc, w_kio, bias, mxu_dtype=mxu_dtype)
    return jnp.transpose(out_nlc, (0, 2, 1))        # (N, C_out, L_out)


def _reference_conv1d(s_past, weight, bias):
    # Independent reference: lax conv with PyTorch-style NCH / OIH layout.
    out = jax.lax.conv_general_dilated(
        s_past, weight, window_strides=(1,), padding="VALID",
        dimension_numbers=("NCH", "OIH", "NCH"))
    return out + bias[None, :, None]


if __name__ == "__main__":
    # Small shapes consistent with the module's forward: (batch, channels, seq)
    N, C, L, K = 2, 8, 16, 3

    key = jax.random.PRNGKey(0)
    k_x, k_w, k_b = jax.random.split(key, 3)

    # PyTorch Conv1d default init range: uniform(-b, b), b = 1/sqrt(C_in * K).
    bound = 1.0 / np.sqrt(C * K)
    weight = jax.random.uniform(k_w, (C, C, K), jnp.float32, -bound, bound)
    bias = jax.random.uniform(k_b, (C,), jnp.float32, -bound, bound)
    s_past = jax.random.normal(k_x, (N, C, L), jnp.float32)

    fwd = jax.jit(scat_predictor_forward, static_argnames=("mxu_dtype",))
    ref = _reference_conv1d(s_past, weight, bias)

    # f32 MXU operands: tight check against the lax conv reference.
    s_future = jax.block_until_ready(fwd(s_past, weight, bias))
    assert s_future.shape == (N, C, L - K + 1)
    assert jnp.allclose(s_future, ref, atol=1e-5, rtol=1e-5)

    # bf16 MXU operands / f32 accumulation (the v6e / v7x MXU-bound option).
    s_future_bf16 = jax.block_until_ready(
        fwd(s_past, weight, bias, mxu_dtype=jnp.bfloat16))
    assert s_future_bf16.shape == (N, C, L - K + 1)
    assert jnp.allclose(s_future_bf16, ref, atol=1e-1, rtol=1e-1)

    print("KERNEL_OK")
</pallas_src>

<mosaic_0001>
module attributes {stable_mosaic.version = 11 : i64} {
  func.func @_conv1d_kernel(%arg0: i32, %arg1: i32, %arg2: memref<2x18x128xf32, #tpu.memory_space<any>>, %arg3: memref<3x128x128xf32, #tpu.memory_space<vmem>>, %arg4: memref<1x128xf32, #tpu.memory_space<vmem>>, %arg5: memref<1x16x128xf32, #tpu.memory_space<vmem>>, %arg6: memref<2x18x128xf32, #tpu.memory_space<vmem>>, %arg7: memref<2x!tpu.dma_semaphore, #tpu.memory_space<semaphore_mem>>) attributes {dimension_semantics = [#tpu.dimension_semantics<parallel>, #tpu.dimension_semantics<arbitrary>], iteration_bounds = array<i64: 2, 1>, scalar_prefetch = 0 : i64, scratch_operands = 2 : i64, tpu.core_type = #tpu.core_type<tc>, window_params = [{}, {pipeline_mode = #tpu.pipeline_mode<synchronous>, transform_indices = @transform_1, window_bounds = array<i64: 3, 128, 128>}, {pipeline_mode = #tpu.pipeline_mode<synchronous>, transform_indices = @transform_2, window_bounds = array<i64: 1, 128>}, {transform_indices = @transform_3, window_bounds = array<i64: 1, 16, 128>}]} {
    %c2_i32 = arith.constant 2 : i32
    %0 = arith.remsi %arg1, %c2_i32 : i32
    %c0_i32 = arith.constant 0 : i32
    %1 = arith.cmpi eq, %arg1, %c0_i32 : i32
    %2 = arith.extui %1 : i1 to i32
    %c0_i32_0 = arith.constant 0 : i32
    %3 = arith.cmpi ne, %2, %c0_i32_0 : i32
    scf.if %3 {
      %c16_i32_21 = arith.constant 16 : i32
      %39 = arith.muli %arg1, %c16_i32_21 : i32
      %40 = tpu.assume_multiple %39, 8 : i32
      %c0_i32_22 = arith.constant 0 : i32
      %41 = tpu.memref_slice %arg2[%arg0, %40, %c0_i32_22] : memref<2x18x128xf32, #tpu.memory_space<any>> -> memref<1x18x128xf32, #tpu.memory_space<any>>
      %42 = tpu.memref_squeeze %41 : memref<1x18x128xf32, #tpu.memory_space<any>> -> memref<18x128xf32, #tpu.memory_space<any>>
      %c0_i32_23 = arith.constant 0 : i32
      %c0_i32_24 = arith.constant 0 : i32
      %43 = tpu.memref_slice %arg6[%0, %c0_i32_23, %c0_i32_24] : memref<2x18x128xf32, #tpu.memory_space<vmem>> -> memref<1x18x128xf32, #tpu.memory_space<vmem>>
      %44 = tpu.memref_squeeze %43 : memref<1x18x128xf32, #tpu.memory_space<vmem>> -> memref<18x128xf32, #tpu.memory_space<vmem>>
      %45 = tpu.memref_slice %arg7[%0] : memref<2x!tpu.dma_semaphore, #tpu.memory_space<semaphore_mem>> -> memref<1x!tpu.dma_semaphore, #tpu.memory_space<semaphore_mem>>
      %46 = tpu.memref_squeeze %45 : memref<1x!tpu.dma_semaphore, #tpu.memory_space<semaphore_mem>> -> memref<!tpu.dma_semaphore, #tpu.memory_space<semaphore_mem>>
      tpu.enqueue_dma source(%42 : memref<18x128xf32, #tpu.memory_space<any>>) target(%44 : memref<18x128xf32, #tpu.memory_space<vmem>>) target_semaphore(%46 : memref<!tpu.dma_semaphore, #tpu.memory_space<semaphore_mem>>)
    } else {
    }
    %c16_i32 = arith.constant 16 : i32
    %4 = arith.muli %arg1, %c16_i32 : i32
    %5 = tpu.assume_multiple %4, 8 : i32
    %c0_i32_1 = arith.constant 0 : i32
    %6 = tpu.memref_slice %arg2[%arg0, %5, %c0_i32_1] : memref<2x18x128xf32, #tpu.memory_space<any>> -> memref<1x18x128xf32, #tpu.memory_space<any>>
    %7 = tpu.memref_squeeze %6 : memref<1x18x128xf32, #tpu.memory_space<any>> -> memref<18x128xf32, #tpu.memory_space<any>>
    %c0_i32_2 = arith.constant 0 : i32
    %c0_i32_3 = arith.constant 0 : i32
    %8 = tpu.memref_slice %arg6[%0, %c0_i32_2, %c0_i32_3] : memref<2x18x128xf32, #tpu.memory_space<vmem>> -> memref<1x18x128xf32, #tpu.memory_space<vmem>>
    %9 = tpu.memref_squeeze %8 : memref<1x18x128xf32, #tpu.memory_space<vmem>> -> memref<18x128xf32, #tpu.memory_space<vmem>>
    %10 = tpu.memref_slice %arg7[%0] : memref<2x!tpu.dma_semaphore, #tpu.memory_space<semaphore_mem>> -> memref<1x!tpu.dma_semaphore, #tpu.memory_space<semaphore_mem>>
    %11 = tpu.memref_squeeze %10 : memref<1x!tpu.dma_semaphore, #tpu.memory_space<semaphore_mem>> -> memref<!tpu.dma_semaphore, #tpu.memory_space<semaphore_mem>>
    tpu.wait_dma2 semaphore(%11 : memref<!tpu.dma_semaphore, #tpu.memory_space<semaphore_mem>>) src(%7 : memref<18x128xf32, #tpu.memory_space<any>>) dst(%9 : memref<18x128xf32, #tpu.memory_space<vmem>>)
    %c1_i32 = arith.constant 1 : i32
    %12 = arith.addi %arg1, %c1_i32 : i32
    %c1_i32_4 = arith.constant 1 : i32
    %13 = arith.cmpi slt, %12, %c1_i32_4 : i32
    %14 = arith.extui %13 : i1 to i32
    %c0_i32_5 = arith.constant 0 : i32
    %15 = arith.cmpi ne, %14, %c0_i32_5 : i32
    scf.if %15 {
      %c1_i32_21 = arith.constant 1 : i32
      %39 = arith.addi %arg1, %c1_i32_21 : i32
      %c1_i32_22 = arith.constant 1 : i32
      %40 = arith.subi %c1_i32_22, %0 : i32
      %c16_i32_23 = arith.constant 16 : i32
      %41 = arith.muli %39, %c16_i32_23 : i32
      %42 = tpu.assume_multiple %41, 8 : i32
      %c0_i32_24 = arith.constant 0 : i32
      %43 = tpu.memref_slice %arg2[%arg0, %42, %c0_i32_24] : memref<2x18x128xf32, #tpu.memory_space<any>> -> memref<1x18x128xf32, #tpu.memory_space<any>>
      %44 = tpu.memref_squeeze %43 : memref<1x18x128xf32, #tpu.memory_space<any>> -> memref<18x128xf32, #tpu.memory_space<any>>
      %c0_i32_25 = arith.constant 0 : i32
      %c0_i32_26 = arith.constant 0 : i32
      %45 = tpu.memref_slice %arg6[%40, %c0_i32_25, %c0_i32_26] : memref<2x18x128xf32, #tpu.memory_space<vmem>> -> memref<1x18x128xf32, #tpu.memory_space<vmem>>
      %46 = tpu.memref_squeeze %45 : memref<1x18x128xf32, #tpu.memory_space<vmem>> -> memref<18x128xf32, #tpu.memory_space<vmem>>
      %47 = tpu.memref_slice %arg7[%40] : memref<2x!tpu.dma_semaphore, #tpu.memory_space<semaphore_mem>> -> memref<1x!tpu.dma_semaphore, #tpu.memory_space<semaphore_mem>>
      %48 = tpu.memref_squeeze %47 : memref<1x!tpu.dma_semaphore, #tpu.memory_space<semaphore_mem>> -> memref<!tpu.dma_semaphore, #tpu.memory_space<semaphore_mem>>
      tpu.enqueue_dma source(%44 : memref<18x128xf32, #tpu.memory_space<any>>) target(%46 : memref<18x128xf32, #tpu.memory_space<vmem>>) target_semaphore(%48 : memref<!tpu.dma_semaphore, #tpu.memory_space<semaphore_mem>>)
    } else {
    }
    %16 = arith.index_cast %0 : i32 to index
    %c0 = arith.constant 0 : index
    %c0_6 = arith.constant 0 : index
    %17 = vector.load %arg6[%16, %c0, %c0_6] : memref<2x18x128xf32, #tpu.memory_space<vmem>>, vector<1x18x128xf32>
    %18 = vector.shape_cast %17 : vector<1x18x128xf32> to vector<18x128xf32>
    %c0_7 = arith.constant 0 : index
    %c0_8 = arith.constant 0 : index
    %19 = vector.load %arg4[%c0_7, %c0_8] : memref<1x128xf32, #tpu.memory_space<vmem>>, vector<1x128xf32>
    %20 = vector.extract_strided_slice %18 {offsets = [0, 0], sizes = [16, 128], strides = [1, 1]} : vector<18x128xf32> to vector<16x128xf32>
    %c0_9 = arith.constant 0 : index
    %c0_10 = arith.constant 0 : index
    %c0_11 = arith.constant 0 : index
    %21 = vector.load %arg3[%c0_9, %c0_10, %c0_11] : memref<3x128x128xf32, #tpu.memory_space<vmem>>, vector<1x128x128xf32>
    %22 = vector.shape_cast %21 : vector<1x128x128xf32> to vector<128x128xf32>
    %cst = arith.constant dense<0.000000e+00> : vector<16x128xf32>
    %23 = tpu.matmul %20, %22, %cst {dimension_numbers = #tpu.dot_dimension_numbers<[1], [0], [0], [1], [0, 0, 1, 1], [], []>} : vector<16x128xf32>, vector<128x128xf32>, vector<16x128xf32> -> vector<16x128xf32>
    %24 = vector.broadcast %19 : vector<1x128xf32> to vector<16x128xf32>
    %25 = arith.addf %24, %23 : vector<16x128xf32>
    %26 = vector.extract_strided_slice %18 {offsets = [1, 0], sizes = [16, 128], strides = [1, 1]} : vector<18x128xf32> to vector<16x128xf32>
    %c1 = arith.constant 1 : index
    %c0_12 = arith.constant 0 : index
    %c0_13 = arith.constant 0 : index
    %27 = vector.load %arg3[%c1, %c0_12, %c0_13] : memref<3x128x128xf32, #tpu.memory_space<vmem>>, vector<1x128x128xf32>
    %28 = vector.shape_cast %27 : vector<1x128x128xf32> to vector<128x128xf32>
    %cst_14 = arith.constant dense<0.000000e+00> : vector<16x128xf32>
    %29 = tpu.matmul %26, %28, %cst_14 {dimension_numbers = #tpu.dot_dimension_numbers<[1], [0], [0], [1], [0, 0, 1, 1], [], []>} : vector<16x128xf32>, vector<128x128xf32>, vector<16x128xf32> -> vector<16x128xf32>
    %30 = arith.addf %25, %29 : vector<16x128xf32>
    %31 = vector.extract_strided_slice %18 {offsets = [2, 0], sizes = [16, 128], strides = [1, 1]} : vector<18x128xf32> to vector<16x128xf32>
    %c2 = arith.constant 2 : index
    %c0_15 = arith.constant 0 : index
    %c0_16 = arith.constant 0 : index
    %32 = vector.load %arg3[%c2, %c0_15, %c0_16] : memref<3x128x128xf32, #tpu.memory_space<vmem>>, vector<1x128x128xf32>
    %33 = vector.shape_cast %32 : vector<1x128x128xf32> to vector<128x128xf32>
    %cst_17 = arith.constant dense<0.000000e+00> : vector<16x128xf32>
    %34 = tpu.matmul %31, %33, %cst_17 {dimension_numbers = #tpu.dot_dimension_numbers<[1], [0], [0], [1], [0, 0, 1, 1], [], []>} : vector<16x128xf32>, vector<128x128xf32>, vector<16x128xf32> -> vector<16x128xf32>
    %35 = arith.addf %30, %34 : vector<16x128xf32>
    %c0_18 = arith.constant 0 : index
    %c0_19 = arith.constant 0 : index
    %c0_20 = arith.constant 0 : index
    %36 = vector.load %arg5[%c0_18, %c0_19, %c0_20] : memref<1x16x128xf32, #tpu.memory_space<vmem>>, vector<1x16x128xf32>
    %37 = vector.shape_cast %36 : vector<1x16x128xf32> to vector<16x128xf32>
    %38 = vector.shape_cast %35 : vector<16x128xf32> to vector<1x16x128xf32>
    tpu.vector_store %arg5[%c0_18, %c0_19, %c0_20], %38 {strides = array<i32>} : memref<1x16x128xf32, #tpu.memory_space<vmem>>, vector<1x16x128xf32>,
    return
  }
  func.func @transform_1(%arg0: i32, %arg1: i32) -> (i32, i32, i32) {
    %c0_i32 = arith.constant 0 : i32
    %c0_i32_0 = arith.constant 0 : i32
    %c0_i32_1 = arith.constant 0 : i32
    %c0_i32_2 = arith.constant 0 : i32
    return %c0_i32, %c0_i32_0, %c0_i32_1 : i32, i32, i32
  }
  func.func @transform_2(%arg0: i32, %arg1: i32) -> (i32, i32) {
    %c0_i32 = arith.constant 0 : i32
    %c0_i32_0 = arith.constant 0 : i32
    %c0_i32_1 = arith.constant 0 : i32
    return %c0_i32, %c0_i32_0 : i32, i32
  }
  func.func @transform_3(%arg0: i32, %arg1: i32) -> (i32, i32, i32) {
    %c0_i32 = arith.constant 0 : i32
    %c0_i32_0 = arith.constant 0 : i32
    return %arg0, %arg1, %c0_i32 : i32, i32, i32
  }
}

</mosaic_0001>

<llo_original>
// kernel: scat_predictor_forward.1
$region0: #{scat_predictor_forward.1}
  #allocation0 [shape = 'u32[]', space=smem, size = 0x4, offset = 0x4, fixed_abs, tag = 'smem constant byte address 0x4 - core index']
  #allocation1 [shape = 'u32[144,128]{1,0:T(1,128)}', space=vmem, size = 0x12000, scoped, tag = 'internal scratch']
  #allocation2 [shape = 'f32[2,18,128]{2,1,0:T(8,128)}', space=vmem, size = 0x6000, scoped, tag = 'scratch operand']
  #allocation3 [shape = 's32[2]{0}', space=sflag, size = 0x8, scoped, tag = 'scratch operand']
  #allocation4 [shape = 's32[]', space=sflag, size = 0x4, offset = 0, fixed_abs, tag = 'sflag constant byte address 0x0 - dummy sync flag']
  #allocation5 [shape = 's32[]', space=sflag, size = 0x4, offset = 0, fixed_abs, tag = 'sflag constant byte address 0x0 - dummy sync flag']
  %s0 = inlined_call_operand.vmem [shape: f32[2,18,128], index: 0, kind: input, shape index: {}]
  %s1 = inlined_call_operand.vmem [shape: f32[3,128,128], index: 1, kind: input, shape index: {}]
  %s2 = inlined_call_operand.vmem [shape: f32[1,128], index: 2, kind: input, shape index: {}]
  %s3 = inlined_call_operand.vmem [shape: f32[2,16,128], index: 3, kind: output, shape index: {}]
  %s4 = sld [smem:[#allocation0]]
  $region123: #{scat_predictor_forward.1} parent=0
    _
  %s6 = ssub.s32 1, %s4
  %s7 = scalar_select 0, %s6, %s4
  loop: start=0, step=1, limit=4
  $region2: #{scat_predictor_forward.1} parent=0 // loop_pre_header
    _
  $region3: #{scat_predictor_forward.1} parent=0 // loop_header
    %s9 = sphi 0, %s13
    %p10 = scmp.ge.s32.totalorder %s9, 4
    %s16 = sphi 0, %s28
    %s17 = sphi 0, %s24
    %s18 = sphi 0, %s16
    %s19 = sphi 0, %s17
    %s20 = sphi 0, %s18
    %s21 = sphi 0, %s19
    %s29 = sphi 0, %s29
    %s31 = sphi 0, %s29
    %s32 = sphi 0, %s31
    %s46 = sphi 0, %s32
    %s50 = sphi 0, %s50
    %s52 = sphi 0, %s50
    %s53 = sphi 0, %s52
    %s67 = sphi 0, %s53
    %s75 = sphi 0, %s77
    %s78 = sphi 0, %s75
    %s79 = sphi 0, %s78
    %s95 = sphi 0, %s79
  $region4: #{scat_predictor_forward.1} parent=0 // loop_header_branch
    %12 = sbr.rel (%p10) target = $region8
  $region5: #{scat_predictor_forward.1} parent=0 // loop_body
    %s14 = ssub.s32 %s9, 1
    %s15 = ssub.s32 %s9, 2
    %s22 = sadd.s32 1, %s17
    %p23 = scmp.ge.s32.totalorder %s22, 1
    %s24 = scalar_select %p23, 0, %s22
    %s25 = sadd.s32 1, %s16
    %s26 = scalar_select %p23, %s25, %s16
    %p27 = scmp.ge.s32.totalorder %s26, 2
    %s28 = scalar_select %p27, 0, %s26
    %s30 = sadd.s32 %s29, 1
    %p33 = scmp.eq.s32.totalorder %s9, 1
    %p34 = scmp.ne.s32.totalorder %s29, %s31
    %p35 = scmp.eq.s32.totalorder %s9, 0
    %p36 = por %p34, %p35
    %p37 = scmp.ne.s32.totalorder %s29, %s31
    %p38 = scmp.eq.s32.totalorder %s14, 1
    %p39 = por %p37, %p38
    %p40 = scmp.ne.s32.totalorder %s31, %s32
    %p41 = scmp.eq.s32.totalorder %s14, 0
    %p42 = por %p40, %p41
    %p43 = scmp.ne.s32.totalorder %s31, %s32
    %p44 = scmp.eq.s32.totalorder %s15, 1
    %p45 = por %p43, %p44
    %p47 = scmp.ne.s32.totalorder %s32, %s46
    %p48 = scmp.eq.s32.totalorder %s15, 0
    %p49 = por %p47, %p48
    %s51 = sadd.s32 %s50, 1
    %p54 = scmp.eq.s32.totalorder %s9, 1
    %p55 = scmp.ne.s32.totalorder %s50, %s52
    %p56 = scmp.eq.s32.totalorder %s9, 0
    %p57 = por %p55, %p56
    %p58 = scmp.ne.s32.totalorder %s50, %s52
    %p59 = scmp.eq.s32.totalorder %s14, 1
    %p60 = por %p58, %p59
    %p61 = scmp.ne.s32.totalorder %s52, %s53
    %p62 = scmp.eq.s32.totalorder %s14, 0
    %p63 = por %p61, %p62
    %p64 = scmp.ne.s32.totalorder %s52, %s53
    %p65 = scmp.eq.s32.totalorder %s15, 1
    %p66 = por %p64, %p65
    %p68 = scmp.ne.s32.totalorder %s53, %s67
    %p69 = scmp.eq.s32.totalorder %s15, 0
    %p70 = por %p68, %p69
    %s71 = ssub.s32 %s16, %s28
    %s72 = ssub.s32 %s17, %s24
    %s73 = sor.u32 %s71, %s72
    %p74 = scmp.eq.s32.totalorder %s73, 0
    %s76 = sadd.s32 %s75, 1
    %s77 = scalar_select %p74, %s75, %s76
    %p80 = pneg %p74
    %p81 = scmp.eq.s32.totalorder %s9, 1
    %p82 = por %p80, %p81
    %p83 = scmp.ne.s32.totalorder %s75, %s78
    %p84 = scmp.eq.s32.totalorder %s9, 0
    %p85 = por %p83, %p84
    %p86 = scmp.ne.s32.totalorder %s75, %s78
    %p87 = scmp.eq.s32.totalorder %s14, 1
    %p88 = por %p86, %p87
    %p89 = scmp.ne.s32.totalorder %s78, %s79
    %p90 = scmp.eq.s32.totalorder %s14, 0
    %p91 = por %p89, %p90
    %p92 = scmp.ne.s32.totalorder %s78, %s79
    %p93 = scmp.eq.s32.totalorder %s15, 1
    %p94 = por %p92, %p93
    %p96 = scmp.ne.s32.totalorder %s79, %s95
    %p97 = scmp.eq.s32.totalorder %s15, 0
    %p98 = por %p96, %p97
    %p99 = scmp.le.s32.totalorder 1, %s9
    %p100 = scmp.lt.s32.totalorder %s9, 3
    %p101 = pnand %p99, %p100
    %p102 = pneg %p101
    // Predicated region
    $region9: #{scat_predictor_forward.1} parent=5 // pred_check
      _
    $region10: #{scat_predictor_forward.1} parent=5 // pred_check_branch
      %104 = sbr.rel (%p101) target = $region12
    $region11: #{scat_predictor_forward.1} parent=5 // pred_region
      %s105 = ssub.s32 %s9, 1
      // Predicated region
      $region13: #{scat_predictor_forward.1} parent=11 // pred_check
        %p106 = pneg %p42
      $region14: #{scat_predictor_forward.1} parent=11 // pred_check_branch
        %108 = sbr.rel (%p106) target = $region16
      $region15: #{scat_predictor_forward.1} parent=11 // pred_region
        _
      $region16: #{scat_predictor_forward.1} parent=11 // pred_fallthru
        _
      // Predicated region
      $region17: #{scat_predictor_forward.1} parent=11 // pred_check
        %p109 = pneg %p63
      $region18: #{scat_predictor_forward.1} parent=11 // pred_check_branch
        %111 = sbr.rel (%p109) target = $region20
      $region19: #{scat_predictor_forward.1} parent=11 // pred_region
        _
      $region20: #{scat_predictor_forward.1} parent=11 // pred_fallthru
        _
    $region12: #{scat_predictor_forward.1} parent=5 // pred_fallthru
      _
    %p112 = scmp.lt.s32.totalorder %s9, 2
    // Predicated region
    $region21: #{scat_predictor_forward.1} parent=5 // pred_check
      %p113 = pneg %p112
    $region22: #{scat_predictor_forward.1} parent=5 // pred_check_branch
      %115 = sbr.rel (%p113) target = $region24
    $region23: #{scat_predictor_forward.1} parent=5 // pred_region
      _
    $region24: #{scat_predictor_forward.1} parent=5 // pred_fallthru
      _
    %p116 = scmp.le.s32.totalorder 1, %s9
    %p117 = scmp.lt.s32.totalorder %s9, 3
    %p118 = pnand %p116, %p117
    %p119 = pneg %p118
    // Predicated region
    $region25: #{scat_predictor_forward.1} parent=5 // pred_check
      _
    $region26: #{scat_predictor_forward.1} parent=5 // pred_check_branch
      %121 = sbr.rel (%p118) target = $region28
    $region27: #{scat_predictor_forward.1} parent=5 // pred_region
      %s122 = ssub.s32 %s9, 1
      %p123 = pneg %p42
      %p124 = pneg %p39
      %p125 = pneg %p63
      %p126 = pneg %p60
      %p127 = pneg %p91
      %p128 = pneg %p88
      %s129 = smul.u32 2, %s19
      %p130 = scmp.lt.s32.totalorder %s18, 1
      %s131 = scalar_select %p130, %s18, 1
      %p132 = scmp.lt.s32.totalorder %s129, 1
      %s133 = scalar_select %p132, %s129, 1
      %s134 = smul.addr %s131, 2
      %s135 = sadd.s32 %s133, %s134
      %s136 = smul.addr %s135, 8
      %s137 = scalar_lea.vmem %s3, %s136
      %s138 = smul.u32 2, %s19
      %p139 = scmp.lt.s32.totalorder %s18, 1
      %s140 = scalar_select %p139, %s18, 1
      %p141 = scmp.lt.s32.totalorder %s138, 1
      %s142 = scalar_select %p141, %s138, 1
      %s143 = smul.addr %s140, 2
      %s144 = sadd.s32 %s142, %s143
      %s145 = smul.addr %s144, 8
      %s146 = scalar_lea.vmem %s3, %s145
      %s147 = smul.u32 2, %s19
      %p148 = scmp.lt.s32.totalorder %s19, 0
      %s149 = ssub.s32 0, %s19
      %s150 = scalar_select %p148, %s149, %s19
      %s151 = sand.u32 %s150, 1
      %s152 = ssub.s32 0, %s151
      %s153 = scalar_select %p148, %s152, %s151
      %p154 = scmp.eq.s32.totalorder %s19, 0
      // Predicated region
      $region29: #{scat_predictor_forward.1} parent=27 // pred_check
        %p155 = pneg %p154
      $region30: #{scat_predictor_forward.1} parent=27 // pred_check_branch
        %157 = sbr.rel (%p155) target = $region32
      $region31: #{scat_predictor_forward.1} parent=27 // pred_region
        %s158 = smul.u32 %s19, 16
        %s159 = smul.u32 %s18, 24
        %s160 = sadd.s32 %s158, %s159
        %s161 = scalar_lea.vmem %s0, %s160
        %s162 = smul.u32 %s153, 24
        %s163 = scalar_lea.vmem [#allocation2], %s162
        %s164 = scalar_lea.sflag [#allocation3], %s153
        %p166 = scmp.lt.u32.totalorder 18, 8
        %p167 = pneg %p166
        // Predicated region
        $region33: #{scat_predictor_forward.1} parent=31 // pred_check
          _
        $region34: #{scat_predictor_forward.1} parent=31 // pred_check_branch
          %169 = sbr.rel (%p166) target = $region36
        $region35: #{scat_predictor_forward.1} parent=31 // pred_region
          %s184 = sand.u32 18, 7
          %p185 = scmp.eq.s32.totalorder %s184, 0
          %p186 = pneg %p185
          // Predicated region
          $region48: #{scat_predictor_forward.1} parent=35 // pred_check
            _
          $region49: #{scat_predictor_forward.1} parent=35 // pred_check_branch
            %188 = sbr.rel (%p185) target = $region51
          $region50: #{scat_predictor_forward.1} parent=35 // pred_region
            %s189 = sand.u32 18, 7
            %s190 = ssub.s32 18, %s189
            %s191 = scalar_lea.vmem %s161, %s190
            %s192 = ssub.s32 18, %s189
            %s193 = scalar_lea.vmem %s163, %s192 [#allocation2]
            loop: start=0, step=1, limit=1
            $region52: #{scat_predictor_forward.1} parent=50 // loop_pre_header
              _
            $region53: #{scat_predictor_forward.1} parent=50 // loop_header
              %s195 = sphi 0, %s199
              %p196 = scmp.ge.s32.totalorder %s195, 1
              %s200 = sphi %s161, %s161
              %s201 = sphi %s163, %s163
            $region54: #{scat_predictor_forward.1} parent=50 // loop_header_branch
              %198 = sbr.rel (%p196) target = $region58
            $region55: #{scat_predictor_forward.1} parent=50 // loop_body
              %v202 = vld [vmem:[%s200] sm:$0xff]
              %203 = vst [vmem:[%s201] sm:$0xff] %v202
              %v204 = vld [vmem:[%s200 + $0x8] sm:$0xff]
              %205 = vst [vmem:[%s201 + $0x8] sm:$0xff] %v204
            $region56: #{scat_predictor_forward.1} parent=50 // loop_footer
              %s199 = sadd.s32 1, %s195
            $region57: #{scat_predictor_forward.1} parent=50 // loop_footer_branch
              %194 = sbr.rel target = $region53
            $region58: #{scat_predictor_forward.1} parent=50 // loop_exit
              _
            %s206 = sshllo.u32 0, %s189
            loop: start=0, step=1, limit=1
            $region59: #{scat_predictor_forward.1} parent=50 // loop_pre_header
              _
            $region60: #{scat_predictor_forward.1} parent=50 // loop_header
              %s208 = sphi 0, %s212
              %p209 = scmp.ge.s32.totalorder %s208, 1
              %s213 = sphi %s191, %s191
              %s214 = sphi %s193, %s193
            $region61: #{scat_predictor_forward.1} parent=50 // loop_header_branch
              %211 = sbr.rel (%p209) target = $region65
            $region62: #{scat_predictor_forward.1} parent=50 // loop_body
              %v215 = vld [vmem:[%s213] sm:%s206]
              %216 = vst [vmem:[%s214] sm:%s206] %v215
            $region63: #{scat_predictor_forward.1} parent=50 // loop_footer
              %s212 = sadd.s32 1, %s208
            $region64: #{scat_predictor_forward.1} parent=50 // loop_footer_branch
              %207 = sbr.rel target = $region60
            $region65: #{scat_predictor_forward.1} parent=50 // loop_exit
              _
          $region51: #{scat_predictor_forward.1} parent=35 // pred_fallthru
            _
        $region36: #{scat_predictor_forward.1} parent=31 // pred_fallthru
          _
        // Predicated region
        $region37: #{scat_predictor_forward.1} parent=31 // pred_check
          %p170 = pneg %p166
        $region38: #{scat_predictor_forward.1} parent=31 // pred_check_branch
          %172 = sbr.rel (%p170) target = $region40
        $region39: #{scat_predictor_forward.1} parent=31 // pred_region
          %s173 = sshllo.u32 0, 18
          loop: start=0, step=1, limit=1
          $region41: #{scat_predictor_forward.1} parent=39 // loop_pre_header
            _
          $region42: #{scat_predictor_forward.1} parent=39 // loop_header
            %s175 = sphi 0, %s179
            %p176 = scmp.ge.s32.totalorder %s175, 1
            %s180 = sphi %s161, %s161
            %s181 = sphi %s163, %s163
          $region43: #{scat_predictor_forward.1} parent=39 // loop_header_branch
            %178 = sbr.rel (%p176) target = $region47
          $region44: #{scat_predictor_forward.1} parent=39 // loop_body
            %v182 = vld [vmem:[%s180] sm:%s173]
            %183 = vst [vmem:[%s181] sm:%s173] %v182
          $region45: #{scat_predictor_forward.1} parent=39 // loop_footer
            %s179 = sadd.s32 1, %s175
          $region46: #{scat_predictor_forward.1} parent=39 // loop_footer_branch
            %174 = sbr.rel target = $region42
          $region47: #{scat_predictor_forward.1} parent=39 // loop_exit
            _
        $region40: #{scat_predictor_forward.1} parent=31 // pred_fallthru
          _
        // Predicated region
        $region66: #{scat_predictor_forward.1} parent=31 // pred_check
          _
        $region67: #{scat_predictor_forward.1} parent=31 // pred_check_branch
          %219 = sbr.rel (0) target = $region69
        $region68: #{scat_predictor_forward.1} parent=31 // pred_region
          %220 = vsyncadd %s164, 288
        $region69: #{scat_predictor_forward.1} parent=31 // pred_fallthru
          _
      $region32: #{scat_predictor_forward.1} parent=27 // pred_fallthru
        _
      %s221 = smul.u32 %s19, 16
      %s222 = smul.u32 %s153, 24
      %s223 = scalar_lea.vmem [#allocation2], %s222
      %s224 = scalar_lea.sflag [#allocation3], %s153
      %s225 = smul.u32 18, 1
      %s226 = sshll.u32 %s225, 4
      %227 = dma.done %s224, %s226
      %s228 = sadd.s32 %s19, 1
      %p229 = scmp.lt.s32.totalorder %s228, 1
      // Predicated region
      $region70: #{scat_predictor_forward.1} parent=27 // pred_check
        %p230 = pneg %p229
      $region71: #{scat_predictor_forward.1} parent=27 // pred_check_branch
        %232 = sbr.rel (%p230) target = $region73
      $region72: #{scat_predictor_forward.1} parent=27 // pred_region
        %s233 = ssub.s32 1, %s153
        %s234 = smul.u32 %s228, 16
        %s235 = smul.u32 %s18, 24
        %s236 = sadd.s32 %s234, %s235
        %s237 = scalar_lea.vmem %s0, %s236
        %s238 = smul.u32 %s233, 24
        %s239 = scalar_lea.vmem [#allocation2], %s238
        %s240 = scalar_lea.sflag [#allocation3], %s233
        %p242 = scmp.lt.u32.totalorder 18, 8
        %p243 = pneg %p242
        // Predicated region
        $region74: #{scat_predictor_forward.1} parent=72 // pred_check
          _
        $region75: #{scat_predictor_forward.1} parent=72 // pred_check_branch
          %245 = sbr.rel (%p242) target = $region77
        $region76: #{scat_predictor_forward.1} parent=72 // pred_region
          %s260 = sand.u32 18, 7
          %p261 = scmp.eq.s32.totalorder %s260, 0
          %p262 = pneg %p261
          // Predicated region
          $region89: #{scat_predictor_forward.1} parent=76 // pred_check
            _
          $region90: #{scat_predictor_forward.1} parent=76 // pred_check_branch
            %264 = sbr.rel (%p261) target = $region92
          $region91: #{scat_predictor_forward.1} parent=76 // pred_region
            %s265 = sand.u32 18, 7
            %s266 = ssub.s32 18, %s265
            %s267 = scalar_lea.vmem %s237, %s266
            %s268 = ssub.s32 18, %s265
            %s269 = scalar_lea.vmem %s239, %s268 [#allocation2]
            loop: start=0, step=1, limit=1
            $region93: #{scat_predictor_forward.1} parent=91 // loop_pre_header
              _
            $region94: #{scat_predictor_forward.1} parent=91 // loop_header
              %s271 = sphi 0, %s275
              %p272 = scmp.ge.s32.totalorder %s271, 1
              %s276 = sphi %s237, %s237
              %s277 = sphi %s239, %s239
            $region95: #{scat_predictor_forward.1} parent=91 // loop_header_branch
              %274 = sbr.rel (%p272) target = $region99
            $region96: #{scat_predictor_forward.1} parent=91 // loop_body
              %v278 = vld [vmem:[%s276] sm:$0xff]
              %279 = vst [vmem:[%s277] sm:$0xff] %v278
              %v280 = vld [vmem:[%s276 + $0x8] sm:$0xff]
              %281 = vst [vmem:[%s277 + $0x8] sm:$0xff] %v280
            $region97: #{scat_predictor_forward.1} parent=91 // loop_footer
              %s275 = sadd.s32 1, %s271
            $region98: #{scat_predictor_forward.1} parent=91 // loop_footer_branch
              %270 = sbr.rel target = $region94
            $region99: #{scat_predictor_forward.1} parent=91 // loop_exit
              _
            %s282 = sshllo.u32 0, %s265
            loop: start=0, step=1, limit=1
            $region100: #{scat_predictor_forward.1} parent=91 // loop_pre_header
              _
            $region101: #{scat_predictor_forward.1} parent=91 // loop_header
              %s284 = sphi 0, %s288
              %p285 = scmp.ge.s32.totalorder %s284, 1
              %s289 = sphi %s267, %s267
              %s290 = sphi %s269, %s269
            $region102: #{scat_predictor_forward.1} parent=91 // loop_header_branch
              %287 = sbr.rel (%p285) target = $region106
            $region103: #{scat_predictor_forward.1} parent=91 // loop_body
              %v291 = vld [vmem:[%s289] sm:%s282]
              %292 = vst [vmem:[%s290] sm:%s282] %v291
            $region104: #{scat_predictor_forward.1} parent=91 // loop_footer
              %s288 = sadd.s32 1, %s284
            $region105: #{scat_predictor_forward.1} parent=91 // loop_footer_branch
              %283 = sbr.rel target = $region101
            $region106: #{scat_predictor_forward.1} parent=91 // loop_exit
              _
          $region92: #{scat_predictor_forward.1} parent=76 // pred_fallthru
            _
        $region77: #{scat_predictor_forward.1} parent=72 // pred_fallthru
          _
        // Predicated region
        $region78: #{scat_predictor_forward.1} parent=72 // pred_check
          %p246 = pneg %p242
        $region79: #{scat_predictor_forward.1} parent=72 // pred_check_branch
          %248 = sbr.rel (%p246) target = $region81
        $region80: #{scat_predictor_forward.1} parent=72 // pred_region
          %s249 = sshllo.u32 0, 18
          loop: start=0, step=1, limit=1
          $region82: #{scat_predictor_forward.1} parent=80 // loop_pre_header
            _
          $region83: #{scat_predictor_forward.1} parent=80 // loop_header
            %s251 = sphi 0, %s255
            %p252 = scmp.ge.s32.totalorder %s251, 1
            %s256 = sphi %s237, %s237
            %s257 = sphi %s239, %s239
          $region84: #{scat_predictor_forward.1} parent=80 // loop_header_branch
            %254 = sbr.rel (%p252) target = $region88
          $region85: #{scat_predictor_forward.1} parent=80 // loop_body
            %v258 = vld [vmem:[%s256] sm:%s249]
            %259 = vst [vmem:[%s257] sm:%s249] %v258
          $region86: #{scat_predictor_forward.1} parent=80 // loop_footer
            %s255 = sadd.s32 1, %s251
          $region87: #{scat_predictor_forward.1} parent=80 // loop_footer_branch
            %250 = sbr.rel target = $region83
          $region88: #{scat_predictor_forward.1} parent=80 // loop_exit
            _
        $region81: #{scat_predictor_forward.1} parent=72 // pred_fallthru
          _
        // Predicated region
        $region107: #{scat_predictor_forward.1} parent=72 // pred_check
          _
        $region108: #{scat_predictor_forward.1} parent=72 // pred_check_branch
          %295 = sbr.rel (0) target = $region110
        $region109: #{scat_predictor_forward.1} parent=72 // pred_region
          %296 = vsyncadd %s240, 288
        $region110: #{scat_predictor_forward.1} parent=72 // pred_fallthru
          _
      $region73: #{scat_predictor_forward.1} parent=27 // pred_fallthru
        _
      %v297 = vld [vmem:[%s223] sm:$0xff]
      %v298 = vld [vmem:[%s223 + $0x8] sm:$0xff]
      %v299 = vld [vmem:[%s223 + $0x10] sm:$0x3]
      %v300 = vld [vmem:[%s2] sm:$0x1]
      %v301 = vld [vmem:[%s1] sm:$0xff]
      %v302 = vld [vmem:[%s1 + $0x8] sm:$0xff]
      %v303 = vld [vmem:[%s1 + $0x10] sm:$0xff]
      %v304 = vld [vmem:[%s1 + $0x18] sm:$0xff]
      %v305 = vld [vmem:[%s1 + $0x20] sm:$0xff]
      %v306 = vld [vmem:[%s1 + $0x28] sm:$0xff]
      %v307 = vld [vmem:[%s1 + $0x30] sm:$0xff]
      %v308 = vld [vmem:[%s1 + $0x38] sm:$0xff]
      %v309 = vld [vmem:[%s1 + $0x40] sm:$0xff]
      %v310 = vld [vmem:[%s1 + $0x48] sm:$0xff]
      %v311 = vld [vmem:[%s1 + $0x50] sm:$0xff]
      %v312 = vld [vmem:[%s1 + $0x58] sm:$0xff]
      %v313 = vld [vmem:[%s1 + $0x60] sm:$0xff]
      %v314 = vld [vmem:[%s1 + $0x68] sm:$0xff]
      %v315 = vld [vmem:[%s1 + $0x70] sm:$0xff]
      %v316 = vld [vmem:[%s1 + $0x78] sm:$0xff]
      %317 = vmatprep.subr.mxu0 0.0
      %318 = vmatpush1.msra.mxu0 %v301
      %319 = vmatprep.subr.mxu0 0.0
      %320 = vmatpush1.msra.mxu0 %v302
      %321 = vmatprep.subr.mxu0 0.0
      %322 = vmatpush1.msra.mxu0 %v303
      %323 = vmatprep.subr.mxu0 0.0
      %324 = vmatpush1.msra.mxu0 %v304
      %325 = vmatprep.subr.mxu0 0.0
      %326 = vmatpush1.msra.mxu0 %v305
      %327 = vmatprep.subr.mxu0 0.0
      %328 = vmatpush1.msra.mxu0 %v306
      %329 = vmatprep.subr.mxu0 0.0
      %330 = vmatpush1.msra.mxu0 %v307
      %331 = vmatprep.subr.mxu0 0.0
      %332 = vmatpush1.msra.mxu0 %v308
      %333 = vmatprep.subr.mxu0 0.0
      %334 = vmatpush1.msra.mxu0 %v309
      %335 = vmatprep.subr.mxu0 0.0
      %336 = vmatpush1.msra.mxu0 %v310
      %337 = vmatprep.subr.mxu0 0.0
      %338 = vmatpush1.msra.mxu0 %v311
      %339 = vmatprep.subr.mxu0 0.0
      %340 = vmatpush1.msra.mxu0 %v312
      %341 = vmatprep.subr.mxu0 0.0
      %342 = vmatpush1.msra.mxu0 %v313
      %343 = vmatprep.subr.mxu0 0.0
      %344 = vmatpush1.msra.mxu0 %v314
      %345 = vmatprep.subr.mxu0 0.0
      %346 = vmatpush1.msra.mxu0 %v315
      %347 = vmatprep.subr.mxu0 0.0
      %348 = vmatpush1.msra.mxu0 %v316
      %349 = vmatprep.subr.mxu0 0.0
      %350 = vmatpush1.msra.mxu0 0.0
      %351 = vmatprep.subr.mxu0 0.0
      %352 = vmatpush1.msra.mxu0 0.0
      %353 = vmatprep.subr.mxu0 0.0
      %354 = vmatpush1.msra.mxu0 0.0
      %355 = vmatprep.subr.mxu0 0.0
      %356 = vmatpush1.msra.mxu0 0.0
      %357 = vmatprep.subr.mxu0 0.0
      %358 = vmatpush1.msra.mxu0 0.0
      %359 = vmatprep.subr.mxu0 0.0
      %360 = vmatpush1.msra.mxu0 0.0
      %361 = vmatprep.subr.mxu0 0.0
      %362 = vmatpush1.msra.mxu0 0.0
      %363 = vmatprep.subr.mxu0 0.0
      %364 = vmatpush1.msra.mxu0 0.0
      %365 = vmatprep.subr.mxu0 0.0
      %366 = vmatpush1.msra.mxu0 0.0
      %367 = vmatprep.subr.mxu0 0.0
      %368 = vmatpush1.msra.mxu0 0.0
      %369 = vmatprep.subr.mxu0 0.0
      %370 = vmatpush1.msra.mxu0 0.0
      %371 = vmatprep.subr.mxu0 0.0
      %372 = vmatpush1.msra.mxu0 0.0
      %373 = vmatprep.subr.mxu0 0.0
      %374 = vmatpush1.msra.mxu0 0.0
      %375 = vmatprep.subr.mxu0 0.0
      %376 = vmatpush1.msra.mxu0 0.0
      %377 = vmatprep.subr.mxu0 0.0
      %378 = vmatpush1.msra.mxu0 0.0
      %379 = vmatprep.subr.mxu0 0.0
      %380 = vmatpush1.msra.mxu0 0.0
      %381 = vmatprep.mubr.f32.mxu0 0.0
      %382 = vmatmul.mubr.f32.gmra.mrb[0].mxu0 %v297
      %v383 = vpop.f32.mrb[0].mxu0
      %v384 = vadd.f32 0.0, %v383
      %v385 = vpop.f32.mrb[0].mxu0
      %386 = vmatprep.mubr.f32.mxu0 0.0
      %387 = vmatmul.mubr.f32.gmra.mrb[0].mxu0 %v298
      %v388 = vpop.f32.mrb[0].mxu0
      %v389 = vadd.f32 0.0, %v388
      %v390 = vpop.f32.mrb[0].mxu0
      %391 = vdwg.mxu0
      %v393 = vlaneseq
      %v394 = vshrl.u32 %v393, 7
      %v395 = vsub.s32 0, %v394
      %v396 = vrot.slane %v300, %v395
      %v398 = vadd.f32 %v396, %v384
      %v399 = vadd.f32 %v396, %v389
      %s400 = scalar_lea.vmem %s1, 128
      %v401 = vld [vmem:[%s400] sm:$0xff]
      %v402 = vld [vmem:[%s400 + $0x8] sm:$0xff]
      %v403 = vld [vmem:[%s400 + $0x10] sm:$0xff]
      %v404 = vld [vmem:[%s400 + $0x18] sm:$0xff]
      %v405 = vld [vmem:[%s400 + $0x20] sm:$0xff]
      %v406 = vld [vmem:[%s400 + $0x28] sm:$0xff]
      %v407 = vld [vmem:[%s400 + $0x30] sm:$0xff]
      %v408 = vld [vmem:[%s400 + $0x38] sm:$0xff]
      %v409 = vld [vmem:[%s400 + $0x40] sm:$0xff]
      %v410 = vld [vmem:[%s400 + $0x48] sm:$0xff]
      %v411 = vld [vmem:[%s400 + $0x50] sm:$0xff]
      %v412 = vld [vmem:[%s400 + $0x58] sm:$0xff]
      %v413 = vld [vmem:[%s400 + $0x60] sm:$0xff]
      %v414 = vld [vmem:[%s400 + $0x68] sm:$0xff]
      %v415 = vld [vmem:[%s400 + $0x70] sm:$0xff]
      %v416 = vld [vmem:[%s400 + $0x78] sm:$0xff]
      %vm420 = vcmask 1046528
      %v421 = vrot.slane %v297, 1
      %v422 = vrot.slane %v298, 1
      %v423 = vsel %vm420, %v421, %v422
      %v424 = vrot.slane %v299, 1
      %v425 = vsel %vm420, %v422, %v424
      %428 = vmatprep.subr.mxu0 0.0
      %429 = vmatpush1.msra.mxu0 %v401
      %430 = vmatprep.subr.mxu0 0.0
      %431 = vmatpush1.msra.mxu0 %v402
      %432 = vmatprep.subr.mxu0 0.0
      %433 = vmatpush1.msra.mxu0 %v403
      %434 = vmatprep.subr.mxu0 0.0
      %435 = vmatpush1.msra.mxu0 %v404
      %436 = vmatprep.subr.mxu0 0.0
      %437 = vmatpush1.msra.mxu0 %v405
      %438 = vmatprep.subr.mxu0 0.0
      %439 = vmatpush1.msra.mxu0 %v406
      %440 = vmatprep.subr.mxu0 0.0
      %441 = vmatpush1.msra.mxu0 %v407
      %442 = vmatprep.subr.mxu0 0.0
      %443 = vmatpush1.msra.mxu0 %v408
      %444 = vmatprep.subr.mxu0 0.0
      %445 = vmatpush1.msra.mxu0 %v409
      %446 = vmatprep.subr.mxu0 0.0
      %447 = vmatpush1.msra.mxu0 %v410
      %448 = vmatprep.subr.mxu0 0.0
      %449 = vmatpush1.msra.mxu0 %v411
      %450 = vmatprep.subr.mxu0 0.0
      %451 = vmatpush1.msra.mxu0 %v412
      %452 = vmatprep.subr.mxu0 0.0
      %453 = vmatpush1.msra.mxu0 %v413
      %454 = vmatprep.subr.mxu0 0.0
      %455 = vmatpush1.msra.mxu0 %v414
      %456 = vmatprep.subr.mxu0 0.0
      %457 = vmatpush1.msra.mxu0 %v415
      %458 = vmatprep.subr.mxu0 0.0
      %459 = vmatpush1.msra.mxu0 %v416
      %460 = vmatprep.subr.mxu0 0.0
      %461 = vmatpush1.msra.mxu0 0.0
      %462 = vmatprep.subr.mxu0 0.0
      %463 = vmatpush1.msra.mxu0 0.0
      %464 = vmatprep.subr.mxu0 0.0
      %465 = vmatpush1.msra.mxu0 0.0
      %466 = vmatprep.subr.mxu0 0.0
      %467 = vmatpush1.msra.mxu0 0.0
      %468 = vmatprep.subr.mxu0 0.0
      %469 = vmatpush1.msra.mxu0 0.0
      %470 = vmatprep.subr.mxu0 0.0
      %471 = vmatpush1.msra.mxu0 0.0
      %472 = vmatprep.subr.mxu0 0.0
      %473 = vmatpush1.msra.mxu0 0.0
      %474 = vmatprep.subr.mxu0 0.0
      %475 = vmatpush1.msra.mxu0 0.0
      %476 = vmatprep.subr.mxu0 0.0
      %477 = vmatpush1.msra.mxu0 0.0
      %478 = vmatprep.subr.mxu0 0.0
      %479 = vmatpush1.msra.mxu0 0.0
      %480 = vmatprep.subr.mxu0 0.0
      %481 = vmatpush1.msra.mxu0 0.0
      %482 = vmatprep.subr.mxu0 0.0
      %483 = vmatpush1.msra.mxu0 0.0
      %484 = vmatprep.subr.mxu0 0.0
      %485 = vmatpush1.msra.mxu0 0.0
      %486 = vmatprep.subr.mxu0 0.0
      %487 = vmatpush1.msra.mxu0 0.0
      %488 = vmatprep.subr.mxu0 0.0
      %489 = vmatpush1.msra.mxu0 0.0
      %490 = vmatprep.subr.mxu0 0.0
      %491 = vmatpush1.msra.mxu0 0.0
      %492 = vmatprep.mubr.f32.mxu0 0.0
      %493 = vmatmul.mubr.f32.gmra.mrb[0].mxu0 %v423
      %v494 = vpop.f32.mrb[0].mxu0
      %v495 = vadd.f32 0.0, %v494
      %v496 = vpop.f32.mrb[0].mxu0
      %497 = vmatprep.mubr.f32.mxu0 0.0
      %498 = vmatmul.mubr.f32.gmra.mrb[0].mxu0 %v425
      %v499 = vpop.f32.mrb[0].mxu0
      %v500 = vadd.f32 0.0, %v499
      %v501 = vpop.f32.mrb[0].mxu0
      %502 = vdwg.mxu0
      %v503 = vadd.f32 %v398, %v495
      %v504 = vadd.f32 %v399, %v500
      %s505 = scalar_lea.vmem %s1, 256
      %v506 = vld [vmem:[%s505] sm:$0xff]
      %v507 = vld [vmem:[%s505 + $0x8] sm:$0xff]
      %v508 = vld [vmem:[%s505 + $0x10] sm:$0xff]
      %v509 = vld [vmem:[%s505 + $0x18] sm:$0xff]
      %v510 = vld [vmem:[%s505 + $0x20] sm:$0xff]
      %v511 = vld [vmem:[%s505 + $0x28] sm:$0xff]
      %v512 = vld [vmem:[%s505 + $0x30] sm:$0xff]
      %v513 = vld [vmem:[%s505 + $0x38] sm:$0xff]
      %v514 = vld [vmem:[%s505 + $0x40] sm:$0xff]
      %v515 = vld [vmem:[%s505 + $0x48] sm:$0xff]
      %v516 = vld [vmem:[%s505 + $0x50] sm:$0xff]
      %v517 = vld [vmem:[%s505 + $0x58] sm:$0xff]
      %v518 = vld [vmem:[%s505 + $0x60] sm:$0xff]
      %v519 = vld [vmem:[%s505 + $0x68] sm:$0xff]
      %v520 = vld [vmem:[%s505 + $0x70] sm:$0xff]
      %v521 = vld [vmem:[%s505 + $0x78] sm:$0xff]
      %vm522 = vcmask 1045504
      %v523 = vrot.slane %v297, 2
      %v524 = vrot.slane %v298, 2
      %v525 = vsel %vm522, %v523, %v524
      %v526 = vrot.slane %v299, 2
      %v527 = vsel %vm522, %v524, %v526
      %530 = vmatprep.subr.mxu0 0.0
      %531 = vmatpush1.msra.mxu0 %v506
      %532 = vmatprep.subr.mxu0 0.0
      %533 = vmatpush1.msra.mxu0 %v507
      %534 = vmatprep.subr.mxu0 0.0
      %535 = vmatpush1.msra.mxu0 %v508
      %536 = vmatprep.subr.mxu0 0.0
      %537 = vmatpush1.msra.mxu0 %v509
      %538 = vmatprep.subr.mxu0 0.0
      %539 = vmatpush1.msra.mxu0 %v510
      %540 = vmatprep.subr.mxu0 0.0
      %541 = vmatpush1.msra.mxu0 %v511
      %542 = vmatprep.subr.mxu0 0.0
      %543 = vmatpush1.msra.mxu0 %v512
      %544 = vmatprep.subr.mxu0 0.0
      %545 = vmatpush1.msra.mxu0 %v513
      %546 = vmatprep.subr.mxu0 0.0
      %547 = vmatpush1.msra.mxu0 %v514
      %548 = vmatprep.subr.mxu0 0.0
      %549 = vmatpush1.msra.mxu0 %v515
      %550 = vmatprep.subr.mxu0 0.0
      %551 = vmatpush1.msra.mxu0 %v516
      %552 = vmatprep.subr.mxu0 0.0
      %553 = vmatpush1.msra.mxu0 %v517
      %554 = vmatprep.subr.mxu0 0.0
      %555 = vmatpush1.msra.mxu0 %v518
      %556 = vmatprep.subr.mxu0 0.0
      %557 = vmatpush1.msra.mxu0 %v519
      %558 = vmatprep.subr.mxu0 0.0
      %559 = vmatpush1.msra.mxu0 %v520
      %560 = vmatprep.subr.mxu0 0.0
      %561 = vmatpush1.msra.mxu0 %v521
      %562 = vmatprep.subr.mxu0 0.0
      %563 = vmatpush1.msra.mxu0 0.0
      %564 = vmatprep.subr.mxu0 0.0
      %565 = vmatpush1.msra.mxu0 0.0
      %566 = vmatprep.subr.mxu0 0.0
      %567 = vmatpush1.msra.mxu0 0.0
      %568 = vmatprep.subr.mxu0 0.0
      %569 = vmatpush1.msra.mxu0 0.0
      %570 = vmatprep.subr.mxu0 0.0
      %571 = vmatpush1.msra.mxu0 0.0
      %572 = vmatprep.subr.mxu0 0.0
      %573 = vmatpush1.msra.mxu0 0.0
      %574 = vmatprep.subr.mxu0 0.0
      %575 = vmatpush1.msra.mxu0 0.0
      %576 = vmatprep.subr.mxu0 0.0
      %577 = vmatpush1.msra.mxu0 0.0
      %578 = vmatprep.subr.mxu0 0.0
      %579 = vmatpush1.msra.mxu0 0.0
      %580 = vmatprep.subr.mxu0 0.0
      %581 = vmatpush1.msra.mxu0 0.0
      %582 = vmatprep.subr.mxu0 0.0
      %583 = vmatpush1.msra.mxu0 0.0
      %584 = vmatprep.subr.mxu0 0.0
      %585 = vmatpush1.msra.mxu0 0.0
      %586 = vmatprep.subr.mxu0 0.0
      %587 = vmatpush1.msra.mxu0 0.0
      %588 = vmatprep.subr.mxu0 0.0
      %589 = vmatpush1.msra.mxu0 0.0
      %590 = vmatprep.subr.mxu0 0.0
      %591 = vmatpush1.msra.mxu0 0.0
      %592 = vmatprep.subr.mxu0 0.0
      %593 = vmatpush1.msra.mxu0 0.0
      %594 = vmatprep.mubr.f32.mxu0 0.0
      %595 = vmatmul.mubr.f32.gmra.mrb[0].mxu0 %v525
      %v596 = vpop.f32.mrb[0].mxu0
      %v597 = vadd.f32 0.0, %v596
      %v598 = vpop.f32.mrb[0].mxu0
      %599 = vmatprep.mubr.f32.mxu0 0.0
      %600 = vmatmul.mubr.f32.gmra.mrb[0].mxu0 %v527
      %v601 = vpop.f32.mrb[0].mxu0
      %v602 = vadd.f32 0.0, %v601
      %v603 = vpop.f32.mrb[0].mxu0
      %604 = vdwg.mxu0
      %v605 = vadd.f32 %v503, %v597
      %v606 = vadd.f32 %v504, %v602
      %607 = vst [vmem:[%s146] sm:$0xff] %v605
      %608 = vst [vmem:[%s146 + $0x8] sm:$0xff] %v606
      %s609 = smul.u32 2, %s19
      %p610 = scmp.lt.s32.totalorder %s18, 1
      %s611 = scalar_select %p610, %s18, 1
      %p612 = scmp.lt.s32.totalorder %s609, 1
      %s613 = scalar_select %p612, %s609, 1
      %s614 = smul.addr %s611, 2
      %s615 = sadd.s32 %s613, %s614
      %s616 = smul.addr %s615, 8
      %s617 = scalar_lea.vmem %s3, %s616
      // Predicated region
      $region111: #{scat_predictor_forward.1} parent=27 // pred_check
        %p618 = pneg %p88
      $region112: #{scat_predictor_forward.1} parent=27 // pred_check_branch
        %620 = sbr.rel (%p618) target = $region114
      $region113: #{scat_predictor_forward.1} parent=27 // pred_region
        %s621 = smul.u32 2, %s19
      $region114: #{scat_predictor_forward.1} parent=27 // pred_fallthru
        _
    $region28: #{scat_predictor_forward.1} parent=5 // pred_fallthru
      _
    %p622 = scmp.le.s32.totalorder 2, %s9
    // Predicated region
    $region115: #{scat_predictor_forward.1} parent=5 // pred_check
      %p623 = pneg %p622
    $region116: #{scat_predictor_forward.1} parent=5 // pred_check_branch
      %625 = sbr.rel (%p623) target = $region118
    $region117: #{scat_predictor_forward.1} parent=5 // pred_region
      %s626 = ssub.s32 %s9, 2
      // Predicated region
      $region119: #{scat_predictor_forward.1} parent=117 // pred_check
        %p627 = pneg %p94
      $region120: #{scat_predictor_forward.1} parent=117 // pred_check_branch
        %629 = sbr.rel (%p627) target = $region122
      $region121: #{scat_predictor_forward.1} parent=117 // pred_region
        %s630 = smul.u32 2, %s21
        %p631 = scmp.lt.s32.totalorder %s20, 1
        %s632 = scalar_select %p631, %s20, 1
        %p633 = scmp.lt.s32.totalorder %s630, 1
        %s634 = scalar_select %p633, %s630, 1
        %s635 = smul.addr %s632, 2
        %s636 = sadd.s32 %s634, %s635
        %s637 = smul.addr %s636, 8
        %s638 = scalar_lea.vmem %s3, %s637
      $region122: #{scat_predictor_forward.1} parent=117 // pred_fallthru
        _
    $region118: #{scat_predictor_forward.1} parent=5 // pred_fallthru
      _
  $region6: #{scat_predictor_forward.1} parent=0 // loop_footer
    %s13 = sadd.s32 1, %s9
  $region7: #{scat_predictor_forward.1} parent=0 // loop_footer_branch
    %8 = sbr.rel target = $region3
  $region8: #{scat_predictor_forward.1} parent=0 // loop_exit
    _
  %639 = vsyncmov [#allocation3]
  %s640 = vpop.sfrf %639
  %p641 = scmp.eq.s32.totalorder %s640, 0
  %p642 = pneg %p641
  %644 = shalt.err (%p642)
  %s645 = scalar_lea.sflag [#allocation3], 1
  %646 = vsyncmov %s645
  %s647 = vpop.sfrf %646
  %p648 = scmp.eq.s32.totalorder %s647, 0
  %p649 = pneg %p648
  %651 = shalt.err (%p649)

</llo_original>
